<compile_context>
chip_gen: v5e
topology: v5e:2x2
jax: 0.10.0
libtpu: 0.0.40
codegen_flags: <defaults>
</compile_context>

<pallas_src>
import math
from functools import partial

import numpy as np
import jax
import jax.numpy as jnp
from jax.experimental import pallas as pl
from jax.experimental.pallas import tpu as pltpu


def fern_fused_linear_kernel(x_ref, sel_ref, th_ref, w_ref, lw_ref, b_ref, out_ref):
    # Transposed (batch-in-lanes) layout:
    #   x_ref:   [C, Bt]      input tile, batch on lanes
    #   sel_ref: [D*T, C]     one-hot gather matrix, row (d*T + t) = onehot(ordinals[t, d])
    #   th_ref:  [D*T, 1]     thresholds flattened depth-major
    #   w_ref:   [T, L]       leaf weights (L = 2**D)
    #   lw_ref:  [O, T]       fused-linear weights
    #   b_ref:   [O, 1]       fused-linear bias
    #   out_ref: [O, Bt]
    bt = x_ref.shape[1]
    T, L = w_ref.shape
    DT = sel_ref.shape[0]
    D = DT // T

    # Feature gather for every (depth, tree) pair as an MXU matmul.
    g = jnp.dot(sel_ref[...], x_ref[...], preferred_element_type=jnp.float32)  # [D*T, Bt]
    m = g - th_ref[...]                                                         # [D*T, Bt]

    # Hinge bits -> leaf key (f32 accumulation is exact for small integers) and min|margin|.
    m0 = m[0:T, :]
    key = jnp.where(m0 > 0.0, 1.0, 0.0)                    # [T, Bt]
    minabs = jnp.abs(m0)                                    # [T, Bt]
    for d in range(1, D):                                   # D is small; static unroll
        md = m[d * T:(d + 1) * T, :]
        key = key + jnp.where(md > 0.0, float(2 ** d), 0.0)
        minabs = jnp.minimum(minabs, jnp.abs(md))

    # Leaf-weight lookup weights[t, key[t,b]] via running select (L-1 selects, lane-dense).
    w = w_ref[...]                                          # [T, L]
    leafval = jnp.broadcast_to(w[:, 0:1], (T, bt))          # [T, Bt]
    for l in range(1, L):                                   # L = 2**D is small; static unroll
        leafval = jnp.where(key == float(l), w[:, l:l + 1], leafval)

    fern = leafval * minabs                                 # [T, Bt]

    # Fused linear layer on the MXU, output stays batch-in-lanes.
    out = jnp.dot(lw_ref[...], fern, preferred_element_type=jnp.float32) + b_ref[...]
    out_ref[...] = out.astype(out_ref.dtype)                # [O, Bt]


def prepare_fern_params(thresholds, ordinals, weights, linear_weights, linear_bias,
                        in_channels):
    """One-time parameter preprocessing (hoisted out of the per-call path)."""
    T, D = thresholds.shape
    L = 2 ** D
    O = linear_weights.shape[0]
    assert weights.shape == (T, L)
    assert linear_weights.shape == (O, T)

    ord_dT = jnp.transpose(ordinals).reshape(-1)                       # [D*T], depth-major
    sel = jax.nn.one_hot(ord_dT, in_channels, dtype=jnp.float32)       # [D*T, C]
    th = jnp.transpose(thresholds).reshape(D * T, 1).astype(jnp.float32)
    w = weights.astype(jnp.float32)                                    # [T, L]
    lw = linear_weights.astype(jnp.float32)                            # [O, T]
    b = linear_bias.reshape(O, 1).astype(jnp.float32)                  # [O, 1]
    return (sel, th, w, lw, b)


def _round_up(a, b):
    return ((a + b - 1) // b) * b


@partial(jax.jit, static_argnames=("block_b",))
def random_hinge_fern_fused_linear(x, params, *, block_b=512):
    """x: [B, C] f32, params from prepare_fern_params -> [B, out_channels] f32."""
    sel, th, w, lw, b = params
    B, C = x.shape
    DT, C2 = sel.shape
    assert C2 == C
    T, L = w.shape
    O = lw.shape[0]

    # Batch tile: multiple of 128 (lane width) so the output store is unmasked.
    bt = min(_round_up(block_b, 128), _round_up(B, 128))
    Bp = _round_up(B, bt)

    # VMEM budget (double-buffered x + out tiles); stay well under v7x's 32 MiB scoped default.
    tile_bytes = 2 * (C * bt + O * bt) * 4
    assert tile_bytes < 24 * 1024 * 1024, "batch tile too large for portable VMEM budget"

    # Transpose to batch-in-lanes and pad the batch to a tile multiple.
    xt = jnp.transpose(x.astype(jnp.float32))                          # [C, B]
    if Bp != B:
        xt = jnp.pad(xt, ((0, 0), (0, Bp - B)))

    out_t = pl.pallas_call(
        fern_fused_linear_kernel,
        out_shape=jax.ShapeDtypeStruct((O, Bp), jnp.float32),
        grid_spec=pltpu.PrefetchScalarGridSpec(
            num_scalar_prefetch=0,
            grid=(Bp // bt,),
            in_specs=[
                pl.BlockSpec((C, bt), lambda i: (0, i)),
                # Invariant operands: constant (0,0) block index -> no re-DMA per step.
                pl.BlockSpec((DT, C), lambda i: (0, 0)),
                pl.BlockSpec((DT, 1), lambda i: (0, 0)),
                pl.BlockSpec((T, L), lambda i: (0, 0)),
                pl.BlockSpec((O, T), lambda i: (0, 0)),
                pl.BlockSpec((O, 1), lambda i: (0, 0)),
            ],
            out_specs=pl.BlockSpec((O, bt), lambda i: (0, i)),
        ),
        # Batch axis has no accumulator -> parallel (sharded across TCs on v7x).
        compiler_params=pltpu.CompilerParams(dimension_semantics=("parallel",)),
    )(xt, sel, th, w, lw, b)

    return jnp.transpose(out_t[:, :B])                                 # [B, O]


def reference_forward(x, thresholds, ordinals, weights, linear_weights, linear_bias):
    """Pure-JAX reference of the same forward semantics."""
    T, D = thresholds.shape
    gathered = x[:, ordinals]                                          # [B, T, D]
    m = gathered - thresholds[None]                                    # [B, T, D]
    bits = (m > 0).astype(jnp.int32)
    key = jnp.sum(bits * (2 ** jnp.arange(D, dtype=jnp.int32)), axis=-1)   # [B, T]
    minabs = jnp.min(jnp.abs(m), axis=-1)                              # [B, T]
    leafval = weights[jnp.arange(T)[None, :], key]                     # [B, T]
    fern = leafval * minabs
    return fern @ linear_weights.T + linear_bias[None, :]


if __name__ == "__main__":
    # Module hyperparameters (small, consistent with the PyTorch __init__).
    in_channels = 32        # C
    number_of_trees = 16    # T  (RandomHingeFern's "out_channels")
    out_channels = 8        # O  (fused linear output)
    depth = 4               # D  -> 2**D = 16 leaves
    batch = 8

    key = jax.random.PRNGKey(0)
    k_x, k_th, k_ord, k_w, k_lw, k_lb = jax.random.split(key, 6)

    # Deterministic parameter init matching the PyTorch shapes / distributions.
    thresholds = 6.0 * jax.random.uniform(k_th, (number_of_trees, depth)) - 3.0
    ordinals = jax.random.randint(k_ord, (number_of_trees, depth), 0, in_channels,
                                  dtype=jnp.int32)
    weights = jax.random.normal(k_w, (number_of_trees, 2 ** depth))
    # kaiming_uniform_(a=sqrt(5)) on [O, T] -> bound = 1/sqrt(T); bias bound = 1/sqrt(fan_in=T)
    bound = 1.0 / math.sqrt(number_of_trees)
    linear_weights = jax.random.uniform(k_lw, (out_channels, number_of_trees),
                                        minval=-bound, maxval=bound)
    linear_bias = jax.random.uniform(k_lb, (out_channels,), minval=-bound, maxval=bound)
    # TODO(synk): HingeFern.fix_thresholds (dedup of identical thresholds on a repeated
    # ordinal) is skipped — with continuous random init it is a measure-zero no-op.

    x = jax.random.normal(k_x, (batch, in_channels), dtype=jnp.float32)

    # Parameter preprocessing happens once (module-init time), not per forward call.
    params = prepare_fern_params(thresholds, ordinals, weights,
                                 linear_weights, linear_bias, in_channels)
    params = jax.tree_util.tree_map(jax.block_until_ready, params)

    out = random_hinge_fern_fused_linear(x, params)
    out = jax.block_until_ready(out)

    ref = reference_forward(x, thresholds, ordinals, weights, linear_weights, linear_bias)
    assert out.shape == (batch, out_channels)
    assert np.allclose(np.asarray(out), np.asarray(ref), rtol=1e-5, atol=1e-5), \
        "Pallas kernel disagrees with JAX reference"
    print("KERNEL_OK")
</pallas_src>

<mosaic_0001>
module attributes {stable_mosaic.version = 11 : i64} {
  func.func @fern_fused_linear_kernel(%arg0: i32, %arg1: memref<32x128xf32, #tpu.memory_space<vmem>>, %arg2: memref<64x32xf32, #tpu.memory_space<vmem>>, %arg3: memref<64x1xf32, #tpu.memory_space<vmem>>, %arg4: memref<16x16xf32, #tpu.memory_space<vmem>>, %arg5: memref<8x16xf32, #tpu.memory_space<vmem>>, %arg6: memref<8x1xf32, #tpu.memory_space<vmem>>, %arg7: memref<8x128xf32, #tpu.memory_space<vmem>>) attributes {dimension_semantics = [#tpu.dimension_semantics<parallel>], iteration_bounds = array<i64: 1>, scalar_prefetch = 0 : i64, scratch_operands = 0 : i64, tpu.core_type = #tpu.core_type<tc>, window_params = [{transform_indices = @transform_0, window_bounds = array<i64: 32, 128>}, {pipeline_mode = #tpu.pipeline_mode<synchronous>, transform_indices = @transform_1, window_bounds = array<i64: 64, 32>}, {pipeline_mode = #tpu.pipeline_mode<synchronous>, transform_indices = @transform_2, window_bounds = array<i64: 64, 1>}, {pipeline_mode = #tpu.pipeline_mode<synchronous>, transform_indices = @transform_3, window_bounds = array<i64: 16, 16>}, {pipeline_mode = #tpu.pipeline_mode<synchronous>, transform_indices = @transform_4, window_bounds = array<i64: 8, 16>}, {pipeline_mode = #tpu.pipeline_mode<synchronous>, transform_indices = @transform_5, window_bounds = array<i64: 8, 1>}, {transform_indices = @transform_6, window_bounds = array<i64: 8, 128>}]} {
    %c0 = arith.constant 0 : index
    %c0_0 = arith.constant 0 : index
    %0 = vector.load %arg2[%c0, %c0_0] : memref<64x32xf32, #tpu.memory_space<vmem>>, vector<64x32xf32>
    %c0_1 = arith.constant 0 : index
    %c0_2 = arith.constant 0 : index
    %1 = vector.load %arg1[%c0_1, %c0_2] : memref<32x128xf32, #tpu.memory_space<vmem>>, vector<32x128xf32>
    %cst = arith.constant dense<0.000000e+00> : vector<64x128xf32>
    %2 = tpu.matmul %0, %1, %cst {dimension_numbers = #tpu.dot_dimension_numbers<[1], [0], [0], [1], [0, 0, 1, 1], [], []>} : vector<64x32xf32>, vector<32x128xf32>, vector<64x128xf32> -> vector<64x128xf32>
    %c0_3 = arith.constant 0 : index
    %c0_4 = arith.constant 0 : index
    %3 = vector.load %arg3[%c0_3, %c0_4] : memref<64x1xf32, #tpu.memory_space<vmem>>, vector<64x1xf32>
    %4 = vector.broadcast %3 : vector<64x1xf32> to vector<64x128xf32>
    %5 = arith.subf %2, %4 : vector<64x128xf32>
    %6 = vector.extract_strided_slice %5 {offsets = [0, 0], sizes = [16, 128], strides = [1, 1]} : vector<64x128xf32> to vector<16x128xf32>
    %cst_5 = arith.constant 0.000000e+00 : f32
    %7 = vector.broadcast %cst_5 : f32 to vector<16x128xf32>
    %8 = arith.cmpf ogt, %6, %7 : vector<16x128xf32>
    %cst_6 = arith.constant 1.000000e+00 : f32
    %cst_7 = arith.constant 0.000000e+00 : f32
    %9 = vector.broadcast %cst_6 : f32 to vector<16x128xf32>
    %10 = vector.broadcast %cst_7 : f32 to vector<16x128xf32>
    %11 = arith.select %8, %9, %10 : vector<16x128xi1>, vector<16x128xf32>
    %12 = math.absf %6 : vector<16x128xf32>
    %13 = vector.extract_strided_slice %5 {offsets = [16, 0], sizes = [16, 128], strides = [1, 1]} : vector<64x128xf32> to vector<16x128xf32>
    %cst_8 = arith.constant 0.000000e+00 : f32
    %14 = vector.broadcast %cst_8 : f32 to vector<16x128xf32>
    %15 = arith.cmpf ogt, %13, %14 : vector<16x128xf32>
    %cst_9 = arith.constant 2.000000e+00 : f32
    %cst_10 = arith.constant 0.000000e+00 : f32
    %16 = vector.broadcast %cst_9 : f32 to vector<16x128xf32>
    %17 = vector.broadcast %cst_10 : f32 to vector<16x128xf32>
    %18 = arith.select %15, %16, %17 : vector<16x128xi1>, vector<16x128xf32>
    %19 = arith.addf %11, %18 : vector<16x128xf32>
    %20 = math.absf %13 : vector<16x128xf32>
    %21 = arith.minimumf %12, %20 : vector<16x128xf32>
    %22 = vector.extract_strided_slice %5 {offsets = [32, 0], sizes = [16, 128], strides = [1, 1]} : vector<64x128xf32> to vector<16x128xf32>
    %cst_11 = arith.constant 0.000000e+00 : f32
    %23 = vector.broadcast %cst_11 : f32 to vector<16x128xf32>
    %24 = arith.cmpf ogt, %22, %23 : vector<16x128xf32>
    %cst_12 = arith.constant 4.000000e+00 : f32
    %cst_13 = arith.constant 0.000000e+00 : f32
    %25 = vector.broadcast %cst_12 : f32 to vector<16x128xf32>
    %26 = vector.broadcast %cst_13 : f32 to vector<16x128xf32>
    %27 = arith.select %24, %25, %26 : vector<16x128xi1>, vector<16x128xf32>
    %28 = arith.addf %19, %27 : vector<16x128xf32>
    %29 = math.absf %22 : vector<16x128xf32>
    %30 = arith.minimumf %21, %29 : vector<16x128xf32>
    %31 = vector.extract_strided_slice %5 {offsets = [48, 0], sizes = [16, 128], strides = [1, 1]} : vector<64x128xf32> to vector<16x128xf32>
    %cst_14 = arith.constant 0.000000e+00 : f32
    %32 = vector.broadcast %cst_14 : f32 to vector<16x128xf32>
    %33 = arith.cmpf ogt, %31, %32 : vector<16x128xf32>
    %cst_15 = arith.constant 8.000000e+00 : f32
    %cst_16 = arith.constant 0.000000e+00 : f32
    %34 = vector.broadcast %cst_15 : f32 to vector<16x128xf32>
    %35 = vector.broadcast %cst_16 : f32 to vector<16x128xf32>
    %36 = arith.select %33, %34, %35 : vector<16x128xi1>, vector<16x128xf32>
    %37 = arith.addf %28, %36 : vector<16x128xf32>
    %38 = math.absf %31 : vector<16x128xf32>
    %39 = arith.minimumf %30, %38 : vector<16x128xf32>
    %c0_17 = arith.constant 0 : index
    %c0_18 = arith.constant 0 : index
    %40 = vector.load %arg4[%c0_17, %c0_18] : memref<16x16xf32, #tpu.memory_space<vmem>>, vector<16x16xf32>
    %41 = vector.extract_strided_slice %40 {offsets = [0, 0], sizes = [16, 1], strides = [1, 1]} : vector<16x16xf32> to vector<16x1xf32>
    %42 = vector.shape_cast %41 : vector<16x1xf32> to vector<16x1xf32>
    %43 = vector.broadcast %42 : vector<16x1xf32> to vector<16x128xf32>
    %cst_19 = arith.constant 1.000000e+00 : f32
    %44 = vector.broadcast %cst_19 : f32 to vector<16x128xf32>
    %45 = arith.cmpf oeq, %37, %44 : vector<16x128xf32>
    %46 = vector.extract_strided_slice %40 {offsets = [0, 1], sizes = [16, 1], strides = [1, 1]} : vector<16x16xf32> to vector<16x1xf32>
    %47 = vector.shape_cast %46 : vector<16x1xf32> to vector<16x1xf32>
    %48 = vector.broadcast %47 : vector<16x1xf32> to vector<16x128xf32>
    %49 = arith.select %45, %48, %43 : vector<16x128xi1>, vector<16x128xf32>
    %cst_20 = arith.constant 2.000000e+00 : f32
    %50 = vector.broadcast %cst_20 : f32 to vector<16x128xf32>
    %51 = arith.cmpf oeq, %37, %50 : vector<16x128xf32>
    %52 = vector.extract_strided_slice %40 {offsets = [0, 2], sizes = [16, 1], strides = [1, 1]} : vector<16x16xf32> to vector<16x1xf32>
    %53 = vector.shape_cast %52 : vector<16x1xf32> to vector<16x1xf32>
    %54 = vector.broadcast %53 : vector<16x1xf32> to vector<16x128xf32>
    %55 = arith.select %51, %54, %49 : vector<16x128xi1>, vector<16x128xf32>
    %cst_21 = arith.constant 3.000000e+00 : f32
    %56 = vector.broadcast %cst_21 : f32 to vector<16x128xf32>
    %57 = arith.cmpf oeq, %37, %56 : vector<16x128xf32>
    %58 = vector.extract_strided_slice %40 {offsets = [0, 3], sizes = [16, 1], strides = [1, 1]} : vector<16x16xf32> to vector<16x1xf32>
    %59 = vector.shape_cast %58 : vector<16x1xf32> to vector<16x1xf32>
    %60 = vector.broadcast %59 : vector<16x1xf32> to vector<16x128xf32>
    %61 = arith.select %57, %60, %55 : vector<16x128xi1>, vector<16x128xf32>
    %cst_22 = arith.constant 4.000000e+00 : f32
    %62 = vector.broadcast %cst_22 : f32 to vector<16x128xf32>
    %63 = arith.cmpf oeq, %37, %62 : vector<16x128xf32>
    %64 = vector.extract_strided_slice %40 {offsets = [0, 4], sizes = [16, 1], strides = [1, 1]} : vector<16x16xf32> to vector<16x1xf32>
    %65 = vector.shape_cast %64 : vector<16x1xf32> to vector<16x1xf32>
    %66 = vector.broadcast %65 : vector<16x1xf32> to vector<16x128xf32>
    %67 = arith.select %63, %66, %61 : vector<16x128xi1>, vector<16x128xf32>
    %cst_23 = arith.constant 5.000000e+00 : f32
    %68 = vector.broadcast %cst_23 : f32 to vector<16x128xf32>
    %69 = arith.cmpf oeq, %37, %68 : vector<16x128xf32>
    %70 = vector.extract_strided_slice %40 {offsets = [0, 5], sizes = [16, 1], strides = [1, 1]} : vector<16x16xf32> to vector<16x1xf32>
    %71 = vector.shape_cast %70 : vector<16x1xf32> to vector<16x1xf32>
    %72 = vector.broadcast %71 : vector<16x1xf32> to vector<16x128xf32>
    %73 = arith.select %69, %72, %67 : vector<16x128xi1>, vector<16x128xf32>
    %cst_24 = arith.constant 6.000000e+00 : f32
    %74 = vector.broadcast %cst_24 : f32 to vector<16x128xf32>
    %75 = arith.cmpf oeq, %37, %74 : vector<16x128xf32>
    %76 = vector.extract_strided_slice %40 {offsets = [0, 6], sizes = [16, 1], strides = [1, 1]} : vector<16x16xf32> to vector<16x1xf32>
    %77 = vector.shape_cast %76 : vector<16x1xf32> to vector<16x1xf32>
    %78 = vector.broadcast %77 : vector<16x1xf32> to vector<16x128xf32>
    %79 = arith.select %75, %78, %73 : vector<16x128xi1>, vector<16x128xf32>
    %cst_25 = arith.constant 7.000000e+00 : f32
    %80 = vector.broadcast %cst_25 : f32 to vector<16x128xf32>
    %81 = arith.cmpf oeq, %37, %80 : vector<16x128xf32>
    %82 = vector.extract_strided_slice %40 {offsets = [0, 7], sizes = [16, 1], strides = [1, 1]} : vector<16x16xf32> to vector<16x1xf32>
    %83 = vector.shape_cast %82 : vector<16x1xf32> to vector<16x1xf32>
    %84 = vector.broadcast %83 : vector<16x1xf32> to vector<16x128xf32>
    %85 = arith.select %81, %84, %79 : vector<16x128xi1>, vector<16x128xf32>
    %cst_26 = arith.constant 8.000000e+00 : f32
    %86 = vector.broadcast %cst_26 : f32 to vector<16x128xf32>
    %87 = arith.cmpf oeq, %37, %86 : vector<16x128xf32>
    %88 = vector.extract_strided_slice %40 {offsets = [0, 8], sizes = [16, 1], strides = [1, 1]} : vector<16x16xf32> to vector<16x1xf32>
    %89 = vector.shape_cast %88 : vector<16x1xf32> to vector<16x1xf32>
    %90 = vector.broadcast %89 : vector<16x1xf32> to vector<16x128xf32>
    %91 = arith.select %87, %90, %85 : vector<16x128xi1>, vector<16x128xf32>
    %cst_27 = arith.constant 9.000000e+00 : f32
    %92 = vector.broadcast %cst_27 : f32 to vector<16x128xf32>
    %93 = arith.cmpf oeq, %37, %92 : vector<16x128xf32>
    %94 = vector.extract_strided_slice %40 {offsets = [0, 9], sizes = [16, 1], strides = [1, 1]} : vector<16x16xf32> to vector<16x1xf32>
    %95 = vector.shape_cast %94 : vector<16x1xf32> to vector<16x1xf32>
    %96 = vector.broadcast %95 : vector<16x1xf32> to vector<16x128xf32>
    %97 = arith.select %93, %96, %91 : vector<16x128xi1>, vector<16x128xf32>
    %cst_28 = arith.constant 1.000000e+01 : f32
    %98 = vector.broadcast %cst_28 : f32 to vector<16x128xf32>
    %99 = arith.cmpf oeq, %37, %98 : vector<16x128xf32>
    %100 = vector.extract_strided_slice %40 {offsets = [0, 10], sizes = [16, 1], strides = [1, 1]} : vector<16x16xf32> to vector<16x1xf32>
    %101 = vector.shape_cast %100 : vector<16x1xf32> to vector<16x1xf32>
    %102 = vector.broadcast %101 : vector<16x1xf32> to vector<16x128xf32>
    %103 = arith.select %99, %102, %97 : vector<16x128xi1>, vector<16x128xf32>
    %cst_29 = arith.constant 1.100000e+01 : f32
    %104 = vector.broadcast %cst_29 : f32 to vector<16x128xf32>
    %105 = arith.cmpf oeq, %37, %104 : vector<16x128xf32>
    %106 = vector.extract_strided_slice %40 {offsets = [0, 11], sizes = [16, 1], strides = [1, 1]} : vector<16x16xf32> to vector<16x1xf32>
    %107 = vector.shape_cast %106 : vector<16x1xf32> to vector<16x1xf32>
    %108 = vector.broadcast %107 : vector<16x1xf32> to vector<16x128xf32>
    %109 = arith.select %105, %108, %103 : vector<16x128xi1>, vector<16x128xf32>
    %cst_30 = arith.constant 1.200000e+01 : f32
    %110 = vector.broadcast %cst_30 : f32 to vector<16x128xf32>
    %111 = arith.cmpf oeq, %37, %110 : vector<16x128xf32>
    %112 = vector.extract_strided_slice %40 {offsets = [0, 12], sizes = [16, 1], strides = [1, 1]} : vector<16x16xf32> to vector<16x1xf32>
    %113 = vector.shape_cast %112 : vector<16x1xf32> to vector<16x1xf32>
    %114 = vector.broadcast %113 : vector<16x1xf32> to vector<16x128xf32>
    %115 = arith.select %111, %114, %109 : vector<16x128xi1>, vector<16x128xf32>
    %cst_31 = arith.constant 1.300000e+01 : f32
    %116 = vector.broadcast %cst_31 : f32 to vector<16x128xf32>
    %117 = arith.cmpf oeq, %37, %116 : vector<16x128xf32>
    %118 = vector.extract_strided_slice %40 {offsets = [0, 13], sizes = [16, 1], strides = [1, 1]} : vector<16x16xf32> to vector<16x1xf32>
    %119 = vector.shape_cast %118 : vector<16x1xf32> to vector<16x1xf32>
    %120 = vector.broadcast %119 : vector<16x1xf32> to vector<16x128xf32>
    %121 = arith.select %117, %120, %115 : vector<16x128xi1>, vector<16x128xf32>
    %cst_32 = arith.constant 1.400000e+01 : f32
    %122 = vector.broadcast %cst_32 : f32 to vector<16x128xf32>
    %123 = arith.cmpf oeq, %37, %122 : vector<16x128xf32>
    %124 = vector.extract_strided_slice %40 {offsets = [0, 14], sizes = [16, 1], strides = [1, 1]} : vector<16x16xf32> to vector<16x1xf32>
    %125 = vector.shape_cast %124 : vector<16x1xf32> to vector<16x1xf32>
    %126 = vector.broadcast %125 : vector<16x1xf32> to vector<16x128xf32>
    %127 = arith.select %123, %126, %121 : vector<16x128xi1>, vector<16x128xf32>
    %cst_33 = arith.constant 1.500000e+01 : f32
    %128 = vector.broadcast %cst_33 : f32 to vector<16x128xf32>
    %129 = arith.cmpf oeq, %37, %128 : vector<16x128xf32>
    %130 = vector.extract_strided_slice %40 {offsets = [0, 15], sizes = [16, 1], strides = [1, 1]} : vector<16x16xf32> to vector<16x1xf32>
    %131 = vector.shape_cast %130 : vector<16x1xf32> to vector<16x1xf32>
    %132 = vector.broadcast %131 : vector<16x1xf32> to vector<16x128xf32>
    %133 = arith.select %129, %132, %127 : vector<16x128xi1>, vector<16x128xf32>
    %134 = arith.mulf %133, %39 : vector<16x128xf32>
    %c0_34 = arith.constant 0 : index
    %c0_35 = arith.constant 0 : index
    %135 = vector.load %arg5[%c0_34, %c0_35] : memref<8x16xf32, #tpu.memory_space<vmem>>, vector<8x16xf32>
    %cst_36 = arith.constant dense<0.000000e+00> : vector<8x128xf32>
    %136 = tpu.matmul %135, %134, %cst_36 {dimension_numbers = #tpu.dot_dimension_numbers<[1], [0], [0], [1], [0, 0, 1, 1], [], []>} : vector<8x16xf32>, vector<16x128xf32>, vector<8x128xf32> -> vector<8x128xf32>
    %c0_37 = arith.constant 0 : index
    %c0_38 = arith.constant 0 : index
    %137 = vector.load %arg6[%c0_37, %c0_38] : memref<8x1xf32, #tpu.memory_space<vmem>>, vector<8x1xf32>
    %138 = vector.broadcast %137 : vector<8x1xf32> to vector<8x128xf32>
    %139 = arith.addf %136, %138 : vector<8x128xf32>
    %c0_39 = arith.constant 0 : index
    %c0_40 = arith.constant 0 : index
    %140 = vector.load %arg7[%c0_39, %c0_40] : memref<8x128xf32, #tpu.memory_space<vmem>>, vector<8x128xf32>
    tpu.vector_store %arg7[%c0_39, %c0_40], %139 {strides = array<i32>} : memref<8x128xf32, #tpu.memory_space<vmem>>, vector<8x128xf32>,
    return
  }
  func.func @transform_0(%arg0: i32) -> (i32, i32) {
    %c0_i32 = arith.constant 0 : i32
    %c0_i32_0 = arith.constant 0 : i32
    return %c0_i32, %arg0 : i32, i32
  }
  func.func @transform_1(%arg0: i32) -> (i32, i32) {
    %c0_i32 = arith.constant 0 : i32
    %c0_i32_0 = arith.constant 0 : i32
    %c0_i32_1 = arith.constant 0 : i32
    return %c0_i32, %c0_i32_0 : i32, i32
  }
  func.func @transform_2(%arg0: i32) -> (i32, i32) {
    %c0_i32 = arith.constant 0 : i32
    %c0_i32_0 = arith.constant 0 : i32
    %c0_i32_1 = arith.constant 0 : i32
    return %c0_i32, %c0_i32_0 : i32, i32
  }
  func.func @transform_3(%arg0: i32) -> (i32, i32) {
    %c0_i32 = arith.constant 0 : i32
    %c0_i32_0 = arith.constant 0 : i32
    %c0_i32_1 = arith.constant 0 : i32
    return %c0_i32, %c0_i32_0 : i32, i32
  }
  func.func @transform_4(%arg0: i32) -> (i32, i32) {
    %c0_i32 = arith.constant 0 : i32
    %c0_i32_0 = arith.constant 0 : i32
    %c0_i32_1 = arith.constant 0 : i32
    return %c0_i32, %c0_i32_0 : i32, i32
  }
  func.func @transform_5(%arg0: i32) -> (i32, i32) {
    %c0_i32 = arith.constant 0 : i32
    %c0_i32_0 = arith.constant 0 : i32
    %c0_i32_1 = arith.constant 0 : i32
    return %c0_i32, %c0_i32_0 : i32, i32
  }
  func.func @transform_6(%arg0: i32) -> (i32, i32) {
    %c0_i32 = arith.constant 0 : i32
    %c0_i32_0 = arith.constant 0 : i32
    return %c0_i32, %arg0 : i32, i32
  }
}

</mosaic_0001>

<llo_original>
// kernel: random_hinge_fern_fused_linear.1
$region0: #{random_hinge_fern_fused_linear.1}
  #allocation0 [shape = 'u32[]', space=smem, size = 0x4, offset = 0x4, fixed_abs, tag = 'smem constant byte address 0x4 - core index']
  #allocation1 [shape = 'u32[72,128]{1,0:T(1,128)}', space=vmem, size = 0x9000, scoped, tag = 'internal scratch']
  %s0 = inlined_call_operand.vmem [shape: f32[32,128], index: 0, kind: input, shape index: {}]
  %s1 = inlined_call_operand.vmem [shape: f32[64,32], index: 1, kind: input, shape index: {}]
  %s2 = inlined_call_operand.vmem [shape: f32[64,1], index: 2, kind: input, shape index: {}]
  %s3 = inlined_call_operand.vmem [shape: f32[16,16], index: 3, kind: input, shape index: {}]
  %s4 = inlined_call_operand.vmem [shape: f32[8,16], index: 4, kind: input, shape index: {}]
  %s5 = inlined_call_operand.vmem [shape: f32[8,1], index: 5, kind: input, shape index: {}]
  %s6 = inlined_call_operand.vmem [shape: f32[8,128], index: 6, kind: output, shape index: {}]
  %s7 = sld [smem:[#allocation0]]
  $region34: #{random_hinge_fern_fused_linear.1} parent=0
    _
  %s9 = ssub.s32 1, %s7
  %s10 = scalar_select 0, %s9, %s7
  // Predicated region
  $region2: #{random_hinge_fern_fused_linear.1} parent=0 // pred_check
    _
  $region3: #{random_hinge_fern_fused_linear.1} parent=0 // pred_check_branch
    %12 = sbr.rel (0) target = $region5
  $region4: #{random_hinge_fern_fused_linear.1} parent=0 // pred_region
    _
  $region5: #{random_hinge_fern_fused_linear.1} parent=0 // pred_fallthru
    _
  // Predicated region
  $region6: #{random_hinge_fern_fused_linear.1} parent=0 // pred_check
    _
  $region7: #{random_hinge_fern_fused_linear.1} parent=0 // pred_check_branch
    %14 = sbr.rel (0) target = $region9
  $region8: #{random_hinge_fern_fused_linear.1} parent=0 // pred_region
    _
  $region9: #{random_hinge_fern_fused_linear.1} parent=0 // pred_fallthru
    _
  // Predicated region
  $region10: #{random_hinge_fern_fused_linear.1} parent=0 // pred_check
    _
  $region11: #{random_hinge_fern_fused_linear.1} parent=0 // pred_check_branch
    %16 = sbr.rel (0) target = $region13
  $region12: #{random_hinge_fern_fused_linear.1} parent=0 // pred_region
    _
  $region13: #{random_hinge_fern_fused_linear.1} parent=0 // pred_fallthru
    _
  // Predicated region
  $region14: #{random_hinge_fern_fused_linear.1} parent=0 // pred_check
    _
  $region15: #{random_hinge_fern_fused_linear.1} parent=0 // pred_check_branch
    %18 = sbr.rel (0) target = $region17
  $region16: #{random_hinge_fern_fused_linear.1} parent=0 // pred_region
    _
  $region17: #{random_hinge_fern_fused_linear.1} parent=0 // pred_fallthru
    _
  // Predicated region
  $region18: #{random_hinge_fern_fused_linear.1} parent=0 // pred_check
    _
  $region19: #{random_hinge_fern_fused_linear.1} parent=0 // pred_check_branch
    %20 = sbr.rel (0) target = $region21
  $region20: #{random_hinge_fern_fused_linear.1} parent=0 // pred_region
    _
  $region21: #{random_hinge_fern_fused_linear.1} parent=0 // pred_fallthru
    _
  // Predicated region
  $region22: #{random_hinge_fern_fused_linear.1} parent=0 // pred_check
    _
  $region23: #{random_hinge_fern_fused_linear.1} parent=0 // pred_check_branch
    %22 = sbr.rel (0) target = $region25
  $region24: #{random_hinge_fern_fused_linear.1} parent=0 // pred_region
    _
  $region25: #{random_hinge_fern_fused_linear.1} parent=0 // pred_fallthru
    _
  %v23 = vld [vmem:[%s1] sm:$0xff]
  %v24 = vld [vmem:[%s1 + $0x8] sm:$0xff]
  %v25 = vld [vmem:[%s1 + $0x10] sm:$0xff]
  %v26 = vld [vmem:[%s1 + $0x18] sm:$0xff]
  %v27 = vld [vmem:[%s1 + $0x20] sm:$0xff]
  %v28 = vld [vmem:[%s1 + $0x28] sm:$0xff]
  %v29 = vld [vmem:[%s1 + $0x30] sm:$0xff]
  %v30 = vld [vmem:[%s1 + $0x38] sm:$0xff]
  %v31 = vld [vmem:[%s0] sm:$0xff]
  %v32 = vld [vmem:[%s0 + $0x8] sm:$0xff]
  %v33 = vld [vmem:[%s0 + $0x10] sm:$0xff]
  %v34 = vld [vmem:[%s0 + $0x18] sm:$0xff]
  %vm35 = vcmask 261120
  %v37 = vsel %vm35, %v23, 0
  %v40 = vsel %vm35, %v24, 0
  %v43 = vsel %vm35, %v25, 0
  %v46 = vsel %vm35, %v26, 0
  %v49 = vsel %vm35, %v27, 0
  %v52 = vsel %vm35, %v28, 0
  %v55 = vsel %vm35, %v29, 0
  %v58 = vsel %vm35, %v30, 0
  %60 = vmatpush.msra.mxu0 0.0
  %61 = vmatpush.msra.mxu0 0.0
  %62 = vmatpush.msra.mxu0 0.0
  %63 = vmatpush.msra.mxu0 0.0
  %64 = vmatpush.msra.mxu0 0.0
  %65 = vmatpush.msra.mxu0 0.0
  %66 = vmatpush.msra.mxu0 0.0
  %67 = vmatpush.msra.mxu0 0.0
  %68 = vmatpush.msra.mxu0 0.0
  %69 = vmatpush.msra.mxu0 0.0
  %70 = vmatpush.msra.mxu0 0.0
  %71 = vmatpush.msra.mxu0 0.0
  %72 = vmatpush.msra.mxu0 %v34
  %73 = vmatpush.msra.mxu0 %v33
  %74 = vmatpush.msra.mxu0 %v32
  %75 = vmatpush.msra.mxu0 %v31
  %76 = vmatmul.f32.gmra.mxu0 %v37
  %v77 = vpop.f32.mrf.mxu0
  %v78 = vadd.f32 0.0, %v77
  %79 = vmatmul.f32.gmra.mxu0 %v40
  %v80 = vpop.f32.mrf.mxu0
  %v81 = vadd.f32 0.0, %v80
  %82 = vmatmul.f32.gmra.mxu0 %v43
  %v83 = vpop.f32.mrf.mxu0
  %v84 = vadd.f32 0.0, %v83
  %85 = vmatmul.f32.gmra.mxu0 %v46
  %v86 = vpop.f32.mrf.mxu0
  %v87 = vadd.f32 0.0, %v86
  %88 = vmatmul.f32.gmra.mxu0 %v49
  %v89 = vpop.f32.mrf.mxu0
  %v90 = vadd.f32 0.0, %v89
  %91 = vmatmul.f32.gmra.mxu0 %v52
  %v92 = vpop.f32.mrf.mxu0
  %v93 = vadd.f32 0.0, %v92
  %94 = vmatmul.f32.gmra.mxu0 %v55
  %v95 = vpop.f32.mrf.mxu0
  %v96 = vadd.f32 0.0, %v95
  %97 = vmatmul.f32.gmra.mxu0 %v58
  %v98 = vpop.f32.mrf.mxu0
  %v99 = vadd.f32 0.0, %v98
  %100 = vdwg.mxu0
  %v101 = vld [vmem:[%s2] sm:$0xff]
  %v102 = vld [vmem:[%s2 + $0x8] sm:$0xff]
  %v103 = vld [vmem:[%s2 + $0x10] sm:$0xff]
  %v104 = vld [vmem:[%s2 + $0x18] sm:$0xff]
  %v105 = vld [vmem:[%s2 + $0x20] sm:$0xff]
  %v106 = vld [vmem:[%s2 + $0x28] sm:$0xff]
  %v107 = vld [vmem:[%s2 + $0x30] sm:$0xff]
  %v108 = vld [vmem:[%s2 + $0x38] sm:$0xff]
  %110 = vset.pattern.permute.xlu0 0
  %111 = vperm.xlu0 %110, %v101
  %v112 = vpop.permute.xlu0 %111
  %115 = vset.pattern.permute.xlu0 0
  %116 = vperm.xlu0 %115, %v102
  %v117 = vpop.permute.xlu0 %116
  %120 = vset.pattern.permute.xlu0 0
  %121 = vperm.xlu0 %120, %v103
  %v122 = vpop.permute.xlu0 %121
  %125 = vset.pattern.permute.xlu0 0
  %126 = vperm.xlu0 %125, %v104
  %v127 = vpop.permute.xlu0 %126
  %130 = vset.pattern.permute.xlu0 0
  %131 = vperm.xlu0 %130, %v105
  %v132 = vpop.permute.xlu0 %131
  %135 = vset.pattern.permute.xlu0 0
  %136 = vperm.xlu0 %135, %v106
  %v137 = vpop.permute.xlu0 %136
  %140 = vset.pattern.permute.xlu0 0
  %141 = vperm.xlu0 %140, %v107
  %v142 = vpop.permute.xlu0 %141
  %145 = vset.pattern.permute.xlu0 0
  %146 = vperm.xlu0 %145, %v108
  %v147 = vpop.permute.xlu0 %146
  %v149 = vsub.f32 %v78, %v112
  %v150 = vsub.f32 %v81, %v117
  %v151 = vsub.f32 %v84, %v122
  %v152 = vsub.f32 %v87, %v127
  %v153 = vsub.f32 %v90, %v132
  %v154 = vsub.f32 %v93, %v137
  %v155 = vsub.f32 %v96, %v142
  %v156 = vsub.f32 %v99, %v147
  %vm157 = vcmp.gt.f32.partialorder %v149, 0.0
  %vm158 = vcmp.gt.f32.partialorder %v150, 0.0
  %v159 = vsel %vm157, 1.0, 0.0
  %v160 = vsel %vm158, 1.0, 0.0
  %v161 = vand.u32 2147483647, %v149
  %v162 = vand.u32 2147483647, %v150
  %vm163 = vcmp.gt.f32.partialorder %v151, 0.0
  %vm164 = vcmp.gt.f32.partialorder %v152, 0.0
  %v165 = vsel %vm163, 2.0, 0.0
  %v166 = vsel %vm164, 2.0, 0.0
  %v167 = vadd.f32 %v159, %v165
  %v168 = vadd.f32 %v160, %v166
  %v169 = vand.u32 2147483647, %v151
  %v170 = vand.u32 2147483647, %v152
  %v171 = vmin.f32 %v161, %v169
  %v172 = vmin.f32 %v162, %v170
  %vm173 = vcmp.gt.f32.partialorder %v153, 0.0
  %vm174 = vcmp.gt.f32.partialorder %v154, 0.0
  %v175 = vsel %vm173, 4.0, 0.0
  %v176 = vsel %vm174, 4.0, 0.0
  %v177 = vadd.f32 %v167, %v175
  %v178 = vadd.f32 %v168, %v176
  %v179 = vand.u32 2147483647, %v153
  %v180 = vand.u32 2147483647, %v154
  %v181 = vmin.f32 %v171, %v179
  %v182 = vmin.f32 %v172, %v180
  %vm183 = vcmp.gt.f32.partialorder %v155, 0.0
  %vm184 = vcmp.gt.f32.partialorder %v156, 0.0
  %v185 = vsel %vm183, 8.0, 0.0
  %v186 = vsel %vm184, 8.0, 0.0
  %v187 = vadd.f32 %v177, %v185
  %v188 = vadd.f32 %v178, %v186
  %v189 = vand.u32 2147483647, %v155
  %v190 = vand.u32 2147483647, %v156
  %v191 = vmin.f32 %v181, %v189
  %v192 = vmin.f32 %v182, %v190
  %v193 = vld [vmem:[%s3] sm:$0xff]
  %v194 = vld [vmem:[%s3 + $0x8] sm:$0xff]
  %196 = vset.pattern.permute.xlu0 0
  %197 = vperm.xlu0 %196, %v193
  %v198 = vpop.permute.xlu0 %197
  %201 = vset.pattern.permute.xlu0 0
  %202 = vperm.xlu0 %201, %v194
  %v203 = vpop.permute.xlu0 %202
  %vm205 = vcmp.eq.f32.partialorder %v187, 1.0
  %vm206 = vcmp.eq.f32.partialorder %v188, 1.0
  %207 = vset.pattern.permute.xlu0 1
  %208 = vperm.xlu0 %207, %v193
  %v209 = vpop.permute.xlu0 %208
  %211 = vset.pattern.permute.xlu0 1
  %212 = vperm.xlu0 %211, %v194
  %v213 = vpop.permute.xlu0 %212
  %v215 = vsel %vm205, %v209, %v198
  %v216 = vsel %vm206, %v213, %v203
  %vm217 = vcmp.eq.f32.partialorder %v187, 2.0
  %vm218 = vcmp.eq.f32.partialorder %v188, 2.0
  %219 = vset.pattern.permute.xlu0 2
  %220 = vperm.xlu0 %219, %v193
  %v221 = vpop.permute.xlu0 %220
  %223 = vset.pattern.permute.xlu0 2
  %224 = vperm.xlu0 %223, %v194
  %v225 = vpop.permute.xlu0 %224
  %v227 = vsel %vm217, %v221, %v215
  %v228 = vsel %vm218, %v225, %v216
  %vm229 = vcmp.eq.f32.partialorder %v187, 3.0
  %vm230 = vcmp.eq.f32.partialorder %v188, 3.0
  %231 = vset.pattern.permute.xlu0 3
  %232 = vperm.xlu0 %231, %v193
  %v233 = vpop.permute.xlu0 %232
  %235 = vset.pattern.permute.xlu0 3
  %236 = vperm.xlu0 %235, %v194
  %v237 = vpop.permute.xlu0 %236
  %v239 = vsel %vm229, %v233, %v227
  %v240 = vsel %vm230, %v237, %v228
  %vm241 = vcmp.eq.f32.partialorder %v187, 4.0
  %vm242 = vcmp.eq.f32.partialorder %v188, 4.0
  %243 = vset.pattern.permute.xlu0 4
  %244 = vperm.xlu0 %243, %v193
  %v245 = vpop.permute.xlu0 %244
  %247 = vset.pattern.permute.xlu0 4
  %248 = vperm.xlu0 %247, %v194
  %v249 = vpop.permute.xlu0 %248
  %v251 = vsel %vm241, %v245, %v239
  %v252 = vsel %vm242, %v249, %v240
  %vm253 = vcmp.eq.f32.partialorder %v187, 5.0
  %vm254 = vcmp.eq.f32.partialorder %v188, 5.0
  %255 = vset.pattern.permute.xlu0 5
  %256 = vperm.xlu0 %255, %v193
  %v257 = vpop.permute.xlu0 %256
  %259 = vset.pattern.permute.xlu0 5
  %260 = vperm.xlu0 %259, %v194
  %v261 = vpop.permute.xlu0 %260
  %v263 = vsel %vm253, %v257, %v251
  %v264 = vsel %vm254, %v261, %v252
  %vm265 = vcmp.eq.f32.partialorder %v187, 6.0
  %vm266 = vcmp.eq.f32.partialorder %v188, 6.0
  %267 = vset.pattern.permute.xlu0 6
  %268 = vperm.xlu0 %267, %v193
  %v269 = vpop.permute.xlu0 %268
  %271 = vset.pattern.permute.xlu0 6
  %272 = vperm.xlu0 %271, %v194
  %v273 = vpop.permute.xlu0 %272
  %v275 = vsel %vm265, %v269, %v263
  %v276 = vsel %vm266, %v273, %v264
  %vm277 = vcmp.eq.f32.partialorder %v187, 7.0
  %vm278 = vcmp.eq.f32.partialorder %v188, 7.0
  %279 = vset.pattern.permute.xlu0 7
  %280 = vperm.xlu0 %279, %v193
  %v281 = vpop.permute.xlu0 %280
  %283 = vset.pattern.permute.xlu0 7
  %284 = vperm.xlu0 %283, %v194
  %v285 = vpop.permute.xlu0 %284
  %v287 = vsel %vm277, %v281, %v275
  %v288 = vsel %vm278, %v285, %v276
  %vm289 = vcmp.eq.f32.partialorder %v187, 8.0
  %vm290 = vcmp.eq.f32.partialorder %v188, 8.0
  %291 = vset.pattern.permute.xlu0 8
  %292 = vperm.xlu0 %291, %v193
  %v293 = vpop.permute.xlu0 %292
  %295 = vset.pattern.permute.xlu0 8
  %296 = vperm.xlu0 %295, %v194
  %v297 = vpop.permute.xlu0 %296
  %v299 = vsel %vm289, %v293, %v287
  %v300 = vsel %vm290, %v297, %v288
  %vm301 = vcmp.eq.f32.partialorder %v187, 9.0
  %vm302 = vcmp.eq.f32.partialorder %v188, 9.0
  %303 = vset.pattern.permute.xlu0 9
  %304 = vperm.xlu0 %303, %v193
  %v305 = vpop.permute.xlu0 %304
  %307 = vset.pattern.permute.xlu0 9
  %308 = vperm.xlu0 %307, %v194
  %v309 = vpop.permute.xlu0 %308
  %v311 = vsel %vm301, %v305, %v299
  %v312 = vsel %vm302, %v309, %v300
  %vm313 = vcmp.eq.f32.partialorder %v187, 10.0
  %vm314 = vcmp.eq.f32.partialorder %v188, 10.0
  %315 = vset.pattern.permute.xlu0 10
  %316 = vperm.xlu0 %315, %v193
  %v317 = vpop.permute.xlu0 %316
  %319 = vset.pattern.permute.xlu0 10
  %320 = vperm.xlu0 %319, %v194
  %v321 = vpop.permute.xlu0 %320
  %v323 = vsel %vm313, %v317, %v311
  %v324 = vsel %vm314, %v321, %v312
  %vm325 = vcmp.eq.f32.partialorder %v187, 11.0
  %vm326 = vcmp.eq.f32.partialorder %v188, 11.0
  %327 = vset.pattern.permute.xlu0 11
  %328 = vperm.xlu0 %327, %v193
  %v329 = vpop.permute.xlu0 %328
  %331 = vset.pattern.permute.xlu0 11
  %332 = vperm.xlu0 %331, %v194
  %v333 = vpop.permute.xlu0 %332
  %v335 = vsel %vm325, %v329, %v323
  %v336 = vsel %vm326, %v333, %v324
  %vm337 = vcmp.eq.f32.partialorder %v187, 12.0
  %vm338 = vcmp.eq.f32.partialorder %v188, 12.0
  %339 = vset.pattern.permute.xlu0 12
  %340 = vperm.xlu0 %339, %v193
  %v341 = vpop.permute.xlu0 %340
  %343 = vset.pattern.permute.xlu0 12
  %344 = vperm.xlu0 %343, %v194
  %v345 = vpop.permute.xlu0 %344
  %v347 = vsel %vm337, %v341, %v335
  %v348 = vsel %vm338, %v345, %v336
  %vm349 = vcmp.eq.f32.partialorder %v187, 13.0
  %vm350 = vcmp.eq.f32.partialorder %v188, 13.0
  %351 = vset.pattern.permute.xlu0 13
  %352 = vperm.xlu0 %351, %v193
  %v353 = vpop.permute.xlu0 %352
  %355 = vset.pattern.permute.xlu0 13
  %356 = vperm.xlu0 %355, %v194
  %v357 = vpop.permute.xlu0 %356
  %v359 = vsel %vm349, %v353, %v347
  %v360 = vsel %vm350, %v357, %v348
  %vm361 = vcmp.eq.f32.partialorder %v187, 14.0
  %vm362 = vcmp.eq.f32.partialorder %v188, 14.0
  %363 = vset.pattern.permute.xlu0 14
  %364 = vperm.xlu0 %363, %v193
  %v365 = vpop.permute.xlu0 %364
  %367 = vset.pattern.permute.xlu0 14
  %368 = vperm.xlu0 %367, %v194
  %v369 = vpop.permute.xlu0 %368
  %v371 = vsel %vm361, %v365, %v359
  %v372 = vsel %vm362, %v369, %v360
  %vm373 = vcmp.eq.f32.partialorder %v187, 15.0
  %vm374 = vcmp.eq.f32.partialorder %v188, 15.0
  %375 = vset.pattern.permute.xlu0 15
  %376 = vperm.xlu0 %375, %v193
  %v377 = vpop.permute.xlu0 %376
  %379 = vset.pattern.permute.xlu0 15
  %380 = vperm.xlu0 %379, %v194
  %v381 = vpop.permute.xlu0 %380
  %v383 = vsel %vm373, %v377, %v371
  %v384 = vsel %vm374, %v381, %v372
  %v385 = vmul.f32 %v383, %v191
  %v386 = vmul.f32 %v384, %v192
  %v387 = vld [vmem:[%s4] sm:$0xff]
  %v388 = vld [vmem:[%s5] sm:$0xff]
  %390 = vset.pattern.permute.xlu0 0
  %391 = vperm.xlu0 %390, %v388
  %v392 = vpop.permute.xlu0 %391
  %vm394 = vcmask 130048
  %v396 = vsel %vm394, %v387, 0
  %398 = vmatpush.msra.mxu0 0.0
  %399 = vmatpush.msra.mxu0 0.0
  %400 = vmatpush.msra.mxu0 0.0
  %401 = vmatpush.msra.mxu0 0.0
  %402 = vmatpush.msra.mxu0 0.0
  %403 = vmatpush.msra.mxu0 0.0
  %404 = vmatpush.msra.mxu0 0.0
  %405 = vmatpush.msra.mxu0 0.0
  %406 = vmatpush.msra.mxu0 0.0
  %407 = vmatpush.msra.mxu0 0.0
  %408 = vmatpush.msra.mxu0 0.0
  %409 = vmatpush.msra.mxu0 0.0
  %410 = vmatpush.msra.mxu0 0.0
  %411 = vmatpush.msra.mxu0 0.0
  %412 = vmatpush.msra.mxu0 %v386
  %413 = vmatpush.msra.mxu0 %v385
  %414 = vmatmul.f32.gmra.mxu0 %v396
  %v415 = vpop.f32.mrf.mxu0
  %v416 = vadd.f32 %v392, %v415
  %417 = vdwg.mxu0
  %418 = vst [vmem:[%s6] sm:$0xff] %v416
  // Predicated region
  $region26: #{random_hinge_fern_fused_linear.1} parent=0 // pred_check
    _
  $region27: #{random_hinge_fern_fused_linear.1} parent=0 // pred_check_branch
    %420 = sbr.rel (0) target = $region29
  $region28: #{random_hinge_fern_fused_linear.1} parent=0 // pred_region
    _
  $region29: #{random_hinge_fern_fused_linear.1} parent=0 // pred_fallthru
    _
  // Predicated region
  $region30: #{random_hinge_fern_fused_linear.1} parent=0 // pred_check
    _
  $region31: #{random_hinge_fern_fused_linear.1} parent=0 // pred_check_branch
    %422 = sbr.rel (0) target = $region33
  $region32: #{random_hinge_fern_fused_linear.1} parent=0 // pred_region
    _
  $region33: #{random_hinge_fern_fused_linear.1} parent=0 // pred_fallthru
    _

</llo_original>
